<compile_context>
chip_gen: v5e
topology: v5e:2x2
jax: 0.10.0
libtpu: 0.0.40
codegen_flags: <defaults>
</compile_context>

<pallas_src>
import functools

import jax
import jax.numpy as jnp
import numpy as np
from jax import lax
from jax.experimental import pallas as pl
from jax.experimental.pallas import tpu as pltpu

_LANES = 128


def _round_up(x, m):
    return (x + m - 1) // m * m


def _vmem_limit_bytes():
    # Generation-aware scoped-VMEM limit: ~3/4 of physical VMEM, capped at
    # 96 MiB (v5e/v6e: 128 MiB physical -> 96 MiB; v7x: 64 MiB -> 48 MiB).
    try:
        cap = int(pltpu.get_tpu_info().vmem_capacity_bytes)
    except Exception:  # conservative fallback, safe on every generation
        cap = 64 * 1024 * 1024
    return max(32 * 1024 * 1024, min(cap * 3 // 4, 96 * 1024 * 1024))


def _pick_row_block(n_batch, ho, per_row_bytes, budget_bytes):
    """Largest divisor of `ho` whose slab fits the VMEM budget, preferring to
    keep >= 4 independent grid steps (v7x megacore sharding)."""
    divs = [d for d in range(1, ho + 1) if ho % d == 0]
    fitting = [d for d in divs if d * per_row_bytes <= budget_bytes] or [1]
    pref = [d for d in fitting if n_batch * (ho // d) >= 4]
    return max(pref) if pref else max(fitting)


# --------------------------- conv (k=3, s=2, p=1) ---------------------------

def _conv_ds_kernel(x_ref, xb_ref, w_ref, b_ref, o_ref):
    """One grid step = a TH-row output slab, full 3x3/stride-2 conv.

    x_ref : (TH, 2, 2, Wo+1, C)  padded rows for halves [h0, h0+TH); axes are
                                 (h_half, h_parity, w_parity, w_half, C), bf16
    xb_ref: (2, Wo+1, C)         even-parity boundary padded row at half h0+TH
    w_ref : (3, 3C, Cp)          per-kh weights, K ordered [kw0|kw1|kw2] x C, bf16
    b_ref : (1, Cp)              bias, f32   (resident, constant index_map)
    o_ref : (TH, Wo, Cp)         output slab (lane-dense Cp)
    """
    th, _, _, wo1, c = x_ref.shape
    wo = wo1 - 1
    cp = o_ref.shape[-1]
    m = th * wo

    row_e = x_ref[:, 0]                      # padded rows 2i   : (TH, 2, Wo+1, C)
    row_o = x_ref[:, 1]                      # padded rows 2i+1
    if th > 1:                               # padded rows 2i+2 (shift + halo row)
        row_n = jnp.concatenate([x_ref[1:, 0], xb_ref[...][None]], axis=0)
    else:
        row_n = xb_ref[...][None]

    def taps(rows):
        # horizontal taps: padded cols 2j, 2j+1, 2j+2 folded into K -> (M, 3C)
        t = jnp.concatenate(
            [rows[:, 0, :wo, :], rows[:, 1, :wo, :], rows[:, 0, 1:, :]], axis=-1)
        return t.reshape(m, 3 * c)

    acc = jnp.zeros((m, cp), jnp.float32)
    for kh, rows in enumerate((row_e, row_o, row_n)):   # static unroll: 3 matmuls
        acc = acc + jnp.dot(taps(rows), w_ref[kh],
                            preferred_element_type=jnp.float32)
    acc = acc + b_ref[...].astype(jnp.float32)
    o_ref[...] = acc.reshape(th, wo, cp).astype(o_ref.dtype)


def _conv_downsample(x_nchw, weight, bias, compute_dtype=jnp.bfloat16):
    n, c, h, w = x_nchw.shape
    c_out = weight.shape[0]
    assert weight.shape[1] == c and weight.shape[2:] == (3, 3)
    ho = (h - 1) // 2 + 1
    wo = (w - 1) // 2 + 1
    cp = _round_up(c_out, _LANES)            # lane-dense output width

    # --- single fused pre-pass: NCHW -> padded, parity-split, bf16 NHWC ------
    # (conv padding=1, rounded up so both spatial dims are even; H and W are
    #  each split into (half, parity) so stride-2 taps become plain slices.)
    hp, wp = 2 * (ho + 1), 2 * (wo + 1)
    x_nhwc = jnp.transpose(x_nchw, (0, 2, 3, 1))
    xp = jnp.pad(x_nhwc, ((0, 0), (1, hp - h - 1), (1, wp - w - 1), (0, 0)))
    xr = (xp.reshape(n, ho + 1, 2, wo + 1, 2, c)
            .transpose(0, 1, 2, 4, 3, 5)     # (n, h_half, h_par, w_par, w_half, c)
            .astype(compute_dtype))

    # (C_out, C, 3, 3) -> (kh, kw*C, Cp): per-kh folded K, lane-padded Cout.
    wmat = jnp.transpose(weight, (2, 3, 1, 0)).reshape(3, 3 * c, c_out)
    wmat = jnp.pad(wmat, ((0, 0), (0, 0), (0, cp - c_out))).astype(compute_dtype)
    bvec = jnp.pad(bias, (0, cp - c_out)).astype(jnp.float32).reshape(1, cp)

    # --- generation-aware tile sizing ----------------------------------------
    vmem_limit = _vmem_limit_bytes()
    w_bytes = 9 * c * cp * 2 + cp * 4                    # resident weights + bias
    in_row = 2 * 2 * (wo + 1) * c * 2                    # bf16 input slab / out row
    out_row = wo * cp * x_nchw.dtype.itemsize
    acc_row = wo * cp * 4                                # f32 accumulator temps
    per_row = 2 * in_row + 2 * out_row + 2 * acc_row     # double-buffered I/O
    budget = max(per_row, vmem_limit // 2 - w_bytes)
    th = _pick_row_block(n, ho, per_row, budget)

    out = pl.pallas_call(
        _conv_ds_kernel,
        out_shape=jax.ShapeDtypeStruct((n, ho, wo, cp), x_nchw.dtype),
        grid=(n, ho // th),
        in_specs=[
            # main, non-overlapping TH-half-row block
            pl.BlockSpec((None, th, 2, 2, wo + 1, c),
                         lambda ni, hi: (ni, hi, 0, 0, 0, 0)),
            # 1-row even-parity halo (first row of the next block)
            pl.BlockSpec((None, None, None, 2, wo + 1, c),
                         lambda ni, hi: (ni, (hi + 1) * th, 0, 0, 0, 0)),
            # weights / bias stay resident in VMEM (constant index_map)
            pl.BlockSpec((3, 3 * c, cp), lambda ni, hi: (0, 0, 0)),
            pl.BlockSpec((1, cp), lambda ni, hi: (0, 0)),
        ],
        out_specs=pl.BlockSpec((None, th, wo, cp),
                               lambda ni, hi: (ni, hi, 0, 0)),
        compiler_params=pltpu.CompilerParams(
            dimension_semantics=("parallel", "parallel"),
            vmem_limit_bytes=vmem_limit),
    )(xr, xr, wmat, bvec)

    return out[..., :c_out]                  # lane padding dropped (fused w/ transpose)


# --------------------------- avg-pool (k=2, s=2) ----------------------------

def _avgpool_kernel(x_ref, q_ref, o_ref):
    # x_ref: (TM, 4*Wo) = two adjacent input rows per output row, flattened.
    # q_ref: (4*Wo, Wo)  constant 0 / 0.25 window-selection matrix.
    # The MXU performs the 2x2 pair reduction (lane compaction) in one matmul;
    # f32 operands with a power-of-two scale keep the result exact.
    o_ref[...] = jnp.dot(x_ref[...].astype(jnp.float32), q_ref[...],
                         preferred_element_type=jnp.float32).astype(o_ref.dtype)


def _avgpool_downsample(x_nchw):
    n, c, h, w = x_nchw.shape
    ho, wo = h // 2, w // 2

    # Drop trailing odd row/col (AvgPool2d floor semantics); for even H/W the
    # reshape below is a zero-copy view of the contiguous NCHW tensor.
    xs = x_nchw if (h == 2 * ho and w == 2 * wo) else x_nchw[:, :, :2 * ho, :2 * wo]
    rows = n * c * ho
    lin = 4 * wo                              # rows 2i and 2i+1, width 2*wo each
    xflat = xs.reshape(rows, lin)

    # out[:, j] = 0.25 * (x[2i,2j] + x[2i,2j+1] + x[2i+1,2j] + x[2i+1,2j+1])
    wcol = (np.arange(lin) % (2 * wo)) // 2
    q_np = np.zeros((lin, wo), np.float32)
    q_np[np.arange(lin), wcol] = 0.25
    q = jnp.asarray(q_np)

    vmem_limit = _vmem_limit_bytes()
    row_bytes = lin * x_nchw.dtype.itemsize
    budget = min(8 * 1024 * 1024, vmem_limit // 8)   # ~8 MiB blocks, roofline regime
    tm = min(rows, max(8, (budget // max(row_bytes, 1)) // 8 * 8))

    out = pl.pallas_call(
        _avgpool_kernel,
        out_shape=jax.ShapeDtypeStruct((rows, wo), x_nchw.dtype),
        grid=(pl.cdiv(rows, tm),),
        in_specs=[pl.BlockSpec((tm, lin), lambda i: (i, 0)),
                  pl.BlockSpec((lin, wo), lambda i: (0, 0))],
        out_specs=pl.BlockSpec((tm, wo), lambda i: (i, 0)),
        compiler_params=pltpu.CompilerParams(
            dimension_semantics=("parallel",),
            vmem_limit_bytes=vmem_limit),
    )(xflat, q)
    return out.reshape(n, c, ho, wo)          # free reshape, already NCHW


# --------------------------------- wrapper ----------------------------------

@functools.partial(jax.jit, static_argnames=("use_conv",))
def downsample_forward(x_nchw, weight=None, bias=None, use_conv=True):
    """Forward pass of Downsample (dims=2). Input/output are PyTorch NCHW."""
    if use_conv:
        # single fused post-pass: drop Cp padding + NHWC -> NCHW
        out_nhwc = _conv_downsample(x_nchw, weight, bias)
        return jnp.transpose(out_nhwc, (0, 3, 1, 2))
    # AvgPool path implies out_channels == channels (as in the PyTorch module).
    return _avgpool_downsample(x_nchw)


# ----------------------------------- main ------------------------------------

if __name__ == "__main__":
    key = jax.random.PRNGKey(0)
    k_x, k_w, k_b = jax.random.split(key, 3)

    N, C, H, W = 2, 4, 16, 16
    C_OUT = 8

    x = jax.random.normal(k_x, (N, C, H, W), dtype=jnp.float32)

    fan_in = C * 3 * 3
    bound = 1.0 / np.sqrt(fan_in)
    weight = jax.random.uniform(k_w, (C_OUT, C, 3, 3), jnp.float32, -bound, bound)
    bias = jax.random.uniform(k_b, (C_OUT,), jnp.float32, -bound, bound)

    # ---- use_conv=True path (Conv2d k=3, s=2, p=1) ----
    y = jax.block_until_ready(downsample_forward(x, weight, bias, use_conv=True))
    assert y.shape == (N, C_OUT, H // 2, W // 2)

    # Tight check on the same bf16-rounded operands (kernel uses bf16 MXU
    # operands with f32 accumulation), isolating the conv index math.
    xb = x.astype(jnp.bfloat16).astype(jnp.float32)
    wb = weight.astype(jnp.bfloat16).astype(jnp.float32)
    ref = lax.conv_general_dilated(
        xb, wb, window_strides=(2, 2), padding=((1, 1), (1, 1)),
        dimension_numbers=("NCHW", "OIHW", "NCHW"),
        precision=lax.Precision.HIGHEST,
    ) + bias[None, :, None, None]
    np.testing.assert_allclose(np.asarray(y), np.asarray(ref), rtol=1e-3, atol=1e-3)

    # Loose sanity check vs. the full-f32 reference (bf16 operand rounding).
    ref32 = lax.conv_general_dilated(
        x, weight, window_strides=(2, 2), padding=((1, 1), (1, 1)),
        dimension_numbers=("NCHW", "OIHW", "NCHW"),
        precision=lax.Precision.HIGHEST,
    ) + bias[None, :, None, None]
    np.testing.assert_allclose(np.asarray(y), np.asarray(ref32), rtol=0.1, atol=0.1)

    # ---- use_conv=False path (AvgPool2d 2x2 s=2) ----
    y_pool = jax.block_until_ready(downsample_forward(x, use_conv=False))
    assert y_pool.shape == (N, C, H // 2, W // 2)
    ref_pool = x.reshape(N, C, H // 2, 2, W // 2, 2).mean(axis=(3, 5))
    np.testing.assert_allclose(np.asarray(y_pool), np.asarray(ref_pool),
                               rtol=1e-5, atol=1e-5)

    print("KERNEL_OK")
</pallas_src>

<mosaic_0001>
module attributes {stable_mosaic.version = 11 : i64} {
  func.func @_conv_ds_kernel(%arg0: i32, %arg1: i32, %arg2: memref<1x4x2x2x9x4xbf16, #tpu.memory_space<vmem>>, %arg3: memref<1x1x1x2x9x4xbf16, #tpu.memory_space<vmem>>, %arg4: memref<3x12x128xbf16, #tpu.memory_space<vmem>>, %arg5: memref<1x128xf32, #tpu.memory_space<vmem>>, %arg6: memref<1x4x8x128xf32, #tpu.memory_space<vmem>>) attributes {dimension_semantics = [#tpu.dimension_semantics<parallel>, #tpu.dimension_semantics<parallel>], iteration_bounds = array<i64: 2, 2>, scalar_prefetch = 0 : i64, scratch_operands = 0 : i64, tpu.core_type = #tpu.core_type<tc>, window_params = [{transform_indices = @transform_0, window_bounds = array<i64: 1, 4, 2, 2, 9, 4>}, {transform_indices = @transform_1, window_bounds = array<i64: 1, 1, 1, 2, 9, 4>}, {pipeline_mode = #tpu.pipeline_mode<synchronous>, transform_indices = @transform_2, window_bounds = array<i64: 3, 12, 128>}, {pipeline_mode = #tpu.pipeline_mode<synchronous>, transform_indices = @transform_3, window_bounds = array<i64: 1, 128>}, {transform_indices = @transform_4, window_bounds = array<i64: 1, 4, 8, 128>}]} {
    %c0 = arith.constant 0 : index
    %c0_0 = arith.constant 0 : index
    %c0_1 = arith.constant 0 : index
    %c0_2 = arith.constant 0 : index
    %c0_3 = arith.constant 0 : index
    %c0_4 = arith.constant 0 : index
    %0 = vector.load %arg2[%c0, %c0_0, %c0_1, %c0_2, %c0_3, %c0_4] : memref<1x4x2x2x9x4xbf16, #tpu.memory_space<vmem>>, vector<1x4x1x2x9x4xbf16>
    %1 = vector.shape_cast %0 : vector<1x4x1x2x9x4xbf16> to vector<4x2x9x4xbf16>
    %c0_5 = arith.constant 0 : index
    %c0_6 = arith.constant 0 : index
    %c1 = arith.constant 1 : index
    %c0_7 = arith.constant 0 : index
    %c0_8 = arith.constant 0 : index
    %c0_9 = arith.constant 0 : index
    %2 = vector.load %arg2[%c0_5, %c0_6, %c1, %c0_7, %c0_8, %c0_9] : memref<1x4x2x2x9x4xbf16, #tpu.memory_space<vmem>>, vector<1x4x1x2x9x4xbf16>
    %3 = vector.shape_cast %2 : vector<1x4x1x2x9x4xbf16> to vector<4x2x9x4xbf16>
    %c0_10 = arith.constant 0 : index
    %c1_11 = arith.constant 1 : index
    %c0_12 = arith.constant 0 : index
    %c0_13 = arith.constant 0 : index
    %c0_14 = arith.constant 0 : index
    %c0_15 = arith.constant 0 : index
    %4 = vector.load %arg2[%c0_10, %c1_11, %c0_12, %c0_13, %c0_14, %c0_15] : memref<1x4x2x2x9x4xbf16, #tpu.memory_space<vmem>>, vector<1x3x1x2x9x4xbf16>
    %5 = vector.shape_cast %4 : vector<1x3x1x2x9x4xbf16> to vector<3x2x9x4xbf16>
    %c0_16 = arith.constant 0 : index
    %c0_17 = arith.constant 0 : index
    %c0_18 = arith.constant 0 : index
    %c0_19 = arith.constant 0 : index
    %c0_20 = arith.constant 0 : index
    %c0_21 = arith.constant 0 : index
    %6 = vector.load %arg3[%c0_16, %c0_17, %c0_18, %c0_19, %c0_20, %c0_21] : memref<1x1x1x2x9x4xbf16, #tpu.memory_space<vmem>>, vector<1x1x1x2x9x4xbf16>
    %7 = vector.shape_cast %6 : vector<1x1x1x2x9x4xbf16> to vector<2x9x4xbf16>
    %8 = vector.shape_cast %7 : vector<2x9x4xbf16> to vector<1x2x9x4xbf16>
    %9 = tpu.concatenate %5, %8 in 0 : vector<3x2x9x4xbf16>, vector<1x2x9x4xbf16> -> vector<4x2x9x4xbf16>
    %cst = arith.constant 0.000000e+00 : f32
    %10 = vector.broadcast %cst : f32 to vector<32x128xf32>
    %11 = vector.extract_strided_slice %1 {offsets = [0, 0, 0, 0], sizes = [4, 1, 8, 4], strides = [1, 1, 1, 1]} : vector<4x2x9x4xbf16> to vector<4x1x8x4xbf16>
    %12 = vector.shape_cast %11 : vector<4x1x8x4xbf16> to vector<4x8x4xbf16>
    %13 = vector.extract_strided_slice %1 {offsets = [0, 1, 0, 0], sizes = [4, 1, 8, 4], strides = [1, 1, 1, 1]} : vector<4x2x9x4xbf16> to vector<4x1x8x4xbf16>
    %14 = vector.shape_cast %13 : vector<4x1x8x4xbf16> to vector<4x8x4xbf16>
    %15 = vector.extract_strided_slice %1 {offsets = [0, 0, 1, 0], sizes = [4, 1, 8, 4], strides = [1, 1, 1, 1]} : vector<4x2x9x4xbf16> to vector<4x1x8x4xbf16>
    %16 = vector.shape_cast %15 : vector<4x1x8x4xbf16> to vector<4x8x4xbf16>
    %17 = tpu.concatenate %12, %14, %16 in 2 : vector<4x8x4xbf16>, vector<4x8x4xbf16>, vector<4x8x4xbf16> -> vector<4x8x12xbf16>
    %18 = vector.shape_cast %17 : vector<4x8x12xbf16> to vector<32x12xbf16>
    %c0_22 = arith.constant 0 : index
    %c0_23 = arith.constant 0 : index
    %c0_24 = arith.constant 0 : index
    %19 = vector.load %arg4[%c0_22, %c0_23, %c0_24] : memref<3x12x128xbf16, #tpu.memory_space<vmem>>, vector<1x12x128xbf16>
    %20 = vector.shape_cast %19 : vector<1x12x128xbf16> to vector<12x128xbf16>
    %cst_25 = arith.constant dense<0.000000e+00> : vector<32x128xf32>
    %21 = tpu.matmul %18, %20, %cst_25 {dimension_numbers = #tpu.dot_dimension_numbers<[1], [0], [0], [1], [0, 0, 1, 1], [], []>} : vector<32x12xbf16>, vector<12x128xbf16>, vector<32x128xf32> -> vector<32x128xf32>
    %22 = arith.addf %10, %21 : vector<32x128xf32>
    %23 = vector.extract_strided_slice %3 {offsets = [0, 0, 0, 0], sizes = [4, 1, 8, 4], strides = [1, 1, 1, 1]} : vector<4x2x9x4xbf16> to vector<4x1x8x4xbf16>
    %24 = vector.shape_cast %23 : vector<4x1x8x4xbf16> to vector<4x8x4xbf16>
    %25 = vector.extract_strided_slice %3 {offsets = [0, 1, 0, 0], sizes = [4, 1, 8, 4], strides = [1, 1, 1, 1]} : vector<4x2x9x4xbf16> to vector<4x1x8x4xbf16>
    %26 = vector.shape_cast %25 : vector<4x1x8x4xbf16> to vector<4x8x4xbf16>
    %27 = vector.extract_strided_slice %3 {offsets = [0, 0, 1, 0], sizes = [4, 1, 8, 4], strides = [1, 1, 1, 1]} : vector<4x2x9x4xbf16> to vector<4x1x8x4xbf16>
    %28 = vector.shape_cast %27 : vector<4x1x8x4xbf16> to vector<4x8x4xbf16>
    %29 = tpu.concatenate %24, %26, %28 in 2 : vector<4x8x4xbf16>, vector<4x8x4xbf16>, vector<4x8x4xbf16> -> vector<4x8x12xbf16>
    %30 = vector.shape_cast %29 : vector<4x8x12xbf16> to vector<32x12xbf16>
    %c1_26 = arith.constant 1 : index
    %c0_27 = arith.constant 0 : index
    %c0_28 = arith.constant 0 : index
    %31 = vector.load %arg4[%c1_26, %c0_27, %c0_28] : memref<3x12x128xbf16, #tpu.memory_space<vmem>>, vector<1x12x128xbf16>
    %32 = vector.shape_cast %31 : vector<1x12x128xbf16> to vector<12x128xbf16>
    %cst_29 = arith.constant dense<0.000000e+00> : vector<32x128xf32>
    %33 = tpu.matmul %30, %32, %cst_29 {dimension_numbers = #tpu.dot_dimension_numbers<[1], [0], [0], [1], [0, 0, 1, 1], [], []>} : vector<32x12xbf16>, vector<12x128xbf16>, vector<32x128xf32> -> vector<32x128xf32>
    %34 = arith.addf %22, %33 : vector<32x128xf32>
    %35 = vector.extract_strided_slice %9 {offsets = [0, 0, 0, 0], sizes = [4, 1, 8, 4], strides = [1, 1, 1, 1]} : vector<4x2x9x4xbf16> to vector<4x1x8x4xbf16>
    %36 = vector.shape_cast %35 : vector<4x1x8x4xbf16> to vector<4x8x4xbf16>
    %37 = vector.extract_strided_slice %9 {offsets = [0, 1, 0, 0], sizes = [4, 1, 8, 4], strides = [1, 1, 1, 1]} : vector<4x2x9x4xbf16> to vector<4x1x8x4xbf16>
    %38 = vector.shape_cast %37 : vector<4x1x8x4xbf16> to vector<4x8x4xbf16>
    %39 = vector.extract_strided_slice %9 {offsets = [0, 0, 1, 0], sizes = [4, 1, 8, 4], strides = [1, 1, 1, 1]} : vector<4x2x9x4xbf16> to vector<4x1x8x4xbf16>
    %40 = vector.shape_cast %39 : vector<4x1x8x4xbf16> to vector<4x8x4xbf16>
    %41 = tpu.concatenate %36, %38, %40 in 2 : vector<4x8x4xbf16>, vector<4x8x4xbf16>, vector<4x8x4xbf16> -> vector<4x8x12xbf16>
    %42 = vector.shape_cast %41 : vector<4x8x12xbf16> to vector<32x12xbf16>
    %c2 = arith.constant 2 : index
    %c0_30 = arith.constant 0 : index
    %c0_31 = arith.constant 0 : index
    %43 = vector.load %arg4[%c2, %c0_30, %c0_31] : memref<3x12x128xbf16, #tpu.memory_space<vmem>>, vector<1x12x128xbf16>
    %44 = vector.shape_cast %43 : vector<1x12x128xbf16> to vector<12x128xbf16>
    %cst_32 = arith.constant dense<0.000000e+00> : vector<32x128xf32>
    %45 = tpu.matmul %42, %44, %cst_32 {dimension_numbers = #tpu.dot_dimension_numbers<[1], [0], [0], [1], [0, 0, 1, 1], [], []>} : vector<32x12xbf16>, vector<12x128xbf16>, vector<32x128xf32> -> vector<32x128xf32>
    %46 = arith.addf %34, %45 : vector<32x128xf32>
    %c0_33 = arith.constant 0 : index
    %c0_34 = arith.constant 0 : index
    %47 = vector.load %arg5[%c0_33, %c0_34] : memref<1x128xf32, #tpu.memory_space<vmem>>, vector<1x128xf32>
    %48 = vector.broadcast %47 : vector<1x128xf32> to vector<32x128xf32>
    %49 = arith.addf %46, %48 : vector<32x128xf32>
    %50 = vector.shape_cast %49 : vector<32x128xf32> to vector<4x8x128xf32>
    %c0_35 = arith.constant 0 : index
    %c0_36 = arith.constant 0 : index
    %c0_37 = arith.constant 0 : index
    %c0_38 = arith.constant 0 : index
    %51 = vector.load %arg6[%c0_35, %c0_36, %c0_37, %c0_38] : memref<1x4x8x128xf32, #tpu.memory_space<vmem>>, vector<1x4x8x128xf32>
    %52 = vector.shape_cast %51 : vector<1x4x8x128xf32> to vector<4x8x128xf32>
    %53 = vector.shape_cast %50 : vector<4x8x128xf32> to vector<1x4x8x128xf32>
    tpu.vector_store %arg6[%c0_35, %c0_36, %c0_37, %c0_38], %53 {strides = array<i32>} : memref<1x4x8x128xf32, #tpu.memory_space<vmem>>, vector<1x4x8x128xf32>,
    return
  }
  func.func @transform_0(%arg0: i32, %arg1: i32) -> (i32, i32, i32, i32, i32, i32) {
    %c0_i32 = arith.constant 0 : i32
    %c0_i32_0 = arith.constant 0 : i32
    %c0_i32_1 = arith.constant 0 : i32
    %c0_i32_2 = arith.constant 0 : i32
    %c0_i32_3 = arith.constant 0 : i32
    return %arg0, %arg1, %c0_i32, %c0_i32_0, %c0_i32_1, %c0_i32_2 : i32, i32, i32, i32, i32, i32
  }
  func.func @transform_1(%arg0: i32, %arg1: i32) -> (i32, i32, i32, i32, i32, i32) {
    %c1_i32 = arith.constant 1 : i32
    %0 = arith.addi %arg1, %c1_i32 : i32
    %c4_i32 = arith.constant 4 : i32
    %1 = arith.muli %0, %c4_i32 : i32
    %c0_i32 = arith.constant 0 : i32
    %c0_i32_0 = arith.constant 0 : i32
    %c0_i32_1 = arith.constant 0 : i32
    %c0_i32_2 = arith.constant 0 : i32
    %c0_i32_3 = arith.constant 0 : i32
    return %arg0, %1, %c0_i32, %c0_i32_0, %c0_i32_1, %c0_i32_2 : i32, i32, i32, i32, i32, i32
  }
  func.func @transform_2(%arg0: i32, %arg1: i32) -> (i32, i32, i32) {
    %c0_i32 = arith.constant 0 : i32
    %c0_i32_0 = arith.constant 0 : i32
    %c0_i32_1 = arith.constant 0 : i32
    %c0_i32_2 = arith.constant 0 : i32
    return %c0_i32, %c0_i32_0, %c0_i32_1 : i32, i32, i32
  }
  func.func @transform_3(%arg0: i32, %arg1: i32) -> (i32, i32) {
    %c0_i32 = arith.constant 0 : i32
    %c0_i32_0 = arith.constant 0 : i32
    %c0_i32_1 = arith.constant 0 : i32
    return %c0_i32, %c0_i32_0 : i32, i32
  }
  func.func @transform_4(%arg0: i32, %arg1: i32) -> (i32, i32, i32, i32) {
    %c0_i32 = arith.constant 0 : i32
    %c0_i32_0 = arith.constant 0 : i32
    %c0_i32_1 = arith.constant 0 : i32
    return %arg0, %arg1, %c0_i32, %c0_i32_0 : i32, i32, i32, i32
  }
}

</mosaic_0001>

<llo_original>
// kernel: downsample_forward.1
$region0: #{downsample_forward.1}
  #allocation0 [shape = 'u32[]', space=smem, size = 0x4, offset = 0x4, fixed_abs, tag = 'smem constant byte address 0x4 - core index']
  #allocation1 [shape = 'u32[72,128]{1,0:T(1,128)}', space=vmem, size = 0x9000, scoped, tag = 'internal scratch']
  %s0 = inlined_call_operand.vmem [shape: bf16[2,9,2,2,9,4], index: 0, kind: input, shape index: {}, may-alias: {0,1}]
  %s1 = inlined_call_operand.vmem [shape: bf16[2,9,2,2,9,4], index: 1, kind: input, shape index: {}, may-alias: {0,1}]
  %s2 = inlined_call_operand.vmem [shape: bf16[3,12,128], index: 2, kind: input, shape index: {}]
  %s3 = inlined_call_operand.vmem [shape: f32[1,128], index: 3, kind: input, shape index: {}]
  %s4 = inlined_call_operand.vmem [shape: f32[2,8,8,128], index: 4, kind: output, shape index: {}]
  %s5 = sld [smem:[#allocation0]]
  $region49: #{downsample_forward.1} parent=0
    _
  %s7 = ssub.s32 1, %s5
  %s8 = scalar_select 0, %s7, %s5
  loop: start=0, step=1, limit=6
  $region2: #{downsample_forward.1} parent=0 // loop_pre_header
    _
  $region3: #{downsample_forward.1} parent=0 // loop_header
    %s10 = sphi 0, %s14
    %p11 = scmp.ge.s32.totalorder %s10, 6
    %s17 = sphi 0, %s29
    %s18 = sphi 0, %s25
    %s19 = sphi 0, %s17
    %s20 = sphi 0, %s18
    %s21 = sphi 0, %s19
    %s22 = sphi 0, %s20
    %s34 = sphi 0, %s36
    %s37 = sphi 0, %s34
    %s38 = sphi 0, %s37
    %s54 = sphi 0, %s38
    %s66 = sphi 0, %s68
    %s69 = sphi 0, %s66
    %s70 = sphi 0, %s69
    %s86 = sphi 0, %s70
    %s90 = sphi 0, %s90
    %s92 = sphi 0, %s90
    %s93 = sphi 0, %s92
    %s107 = sphi 0, %s93
    %s111 = sphi 0, %s111
    %s113 = sphi 0, %s111
    %s114 = sphi 0, %s113
    %s128 = sphi 0, %s114
    %s136 = sphi 0, %s138
    %s139 = sphi 0, %s136
    %s140 = sphi 0, %s139
    %s156 = sphi 0, %s140
  $region4: #{downsample_forward.1} parent=0 // loop_header_branch
    %13 = sbr.rel (%p11) target = $region8
  $region5: #{downsample_forward.1} parent=0 // loop_body
    %s15 = ssub.s32 %s10, 1
    %s16 = ssub.s32 %s10, 2
    %s23 = sadd.s32 1, %s18
    %p24 = scmp.ge.s32.totalorder %s23, 2
    %s25 = scalar_select %p24, 0, %s23
    %s26 = sadd.s32 1, %s17
    %s27 = scalar_select %p24, %s26, %s17
    %p28 = scmp.ge.s32.totalorder %s27, 2
    %s29 = scalar_select %p28, 0, %s27
    %s30 = ssub.s32 %s17, %s29
    %s31 = ssub.s32 %s18, %s25
    %s32 = sor.u32 %s30, %s31
    %p33 = scmp.eq.s32.totalorder %s32, 0
    %s35 = sadd.s32 %s34, 1
    %s36 = scalar_select %p33, %s34, %s35
    %p39 = pneg %p33
    %p40 = scmp.eq.s32.totalorder %s10, 3
    %p41 = por %p39, %p40
    %p42 = scmp.ne.s32.totalorder %s34, %s37
    %p43 = scmp.eq.s32.totalorder %s10, 0
    %p44 = por %p42, %p43
    %p45 = scmp.ne.s32.totalorder %s34, %s37
    %p46 = scmp.eq.s32.totalorder %s15, 3
    %p47 = por %p45, %p46
    %p48 = scmp.ne.s32.totalorder %s37, %s38
    %p49 = scmp.eq.s32.totalorder %s15, 0
    %p50 = por %p48, %p49
    %p51 = scmp.ne.s32.totalorder %s37, %s38
    %p52 = scmp.eq.s32.totalorder %s16, 3
    %p53 = por %p51, %p52
    %p55 = scmp.ne.s32.totalorder %s38, %s54
    %p56 = scmp.eq.s32.totalorder %s16, 0
    %p57 = por %p55, %p56
    %s58 = sadd.s32 %s18, 1
    %s59 = smul.u32 %s58, 4
    %s60 = sadd.s32 %s25, 1
    %s61 = smul.u32 %s60, 4
    %s62 = ssub.s32 %s17, %s29
    %s63 = ssub.s32 %s59, %s61
    %s64 = sor.u32 %s62, %s63
    %p65 = scmp.eq.s32.totalorder %s64, 0
    %s67 = sadd.s32 %s66, 1
    %s68 = scalar_select %p65, %s66, %s67
    %p71 = pneg %p65
    %p72 = scmp.eq.s32.totalorder %s10, 3
    %p73 = por %p71, %p72
    %p74 = scmp.ne.s32.totalorder %s66, %s69
    %p75 = scmp.eq.s32.totalorder %s10, 0
    %p76 = por %p74, %p75
    %p77 = scmp.ne.s32.totalorder %s66, %s69
    %p78 = scmp.eq.s32.totalorder %s15, 3
    %p79 = por %p77, %p78
    %p80 = scmp.ne.s32.totalorder %s69, %s70
    %p81 = scmp.eq.s32.totalorder %s15, 0
    %p82 = por %p80, %p81
    %p83 = scmp.ne.s32.totalorder %s69, %s70
    %p84 = scmp.eq.s32.totalorder %s16, 3
    %p85 = por %p83, %p84
    %p87 = scmp.ne.s32.totalorder %s70, %s86
    %p88 = scmp.eq.s32.totalorder %s16, 0
    %p89 = por %p87, %p88
    %s91 = sadd.s32 %s90, 1
    %p94 = scmp.eq.s32.totalorder %s10, 3
    %p95 = scmp.ne.s32.totalorder %s90, %s92
    %p96 = scmp.eq.s32.totalorder %s10, 0
    %p97 = por %p95, %p96
    %p98 = scmp.ne.s32.totalorder %s90, %s92
    %p99 = scmp.eq.s32.totalorder %s15, 3
    %p100 = por %p98, %p99
    %p101 = scmp.ne.s32.totalorder %s92, %s93
    %p102 = scmp.eq.s32.totalorder %s15, 0
    %p103 = por %p101, %p102
    %p104 = scmp.ne.s32.totalorder %s92, %s93
    %p105 = scmp.eq.s32.totalorder %s16, 3
    %p106 = por %p104, %p105
    %p108 = scmp.ne.s32.totalorder %s93, %s107
    %p109 = scmp.eq.s32.totalorder %s16, 0
    %p110 = por %p108, %p109
    %s112 = sadd.s32 %s111, 1
    %p115 = scmp.eq.s32.totalorder %s10, 3
    %p116 = scmp.ne.s32.totalorder %s111, %s113
    %p117 = scmp.eq.s32.totalorder %s10, 0
    %p118 = por %p116, %p117
    %p119 = scmp.ne.s32.totalorder %s111, %s113
    %p120 = scmp.eq.s32.totalorder %s15, 3
    %p121 = por %p119, %p120
    %p122 = scmp.ne.s32.totalorder %s113, %s114
    %p123 = scmp.eq.s32.totalorder %s15, 0
    %p124 = por %p122, %p123
    %p125 = scmp.ne.s32.totalorder %s113, %s114
    %p126 = scmp.eq.s32.totalorder %s16, 3
    %p127 = por %p125, %p126
    %p129 = scmp.ne.s32.totalorder %s114, %s128
    %p130 = scmp.eq.s32.totalorder %s16, 0
    %p131 = por %p129, %p130
    %s132 = ssub.s32 %s17, %s29
    %s133 = ssub.s32 %s18, %s25
    %s134 = sor.u32 %s132, %s133
    %p135 = scmp.eq.s32.totalorder %s134, 0
    %s137 = sadd.s32 %s136, 1
    %s138 = scalar_select %p135, %s136, %s137
    %p141 = pneg %p135
    %p142 = scmp.eq.s32.totalorder %s10, 3
    %p143 = por %p141, %p142
    %p144 = scmp.ne.s32.totalorder %s136, %s139
    %p145 = scmp.eq.s32.totalorder %s10, 0
    %p146 = por %p144, %p145
    %p147 = scmp.ne.s32.totalorder %s136, %s139
    %p148 = scmp.eq.s32.totalorder %s15, 3
    %p149 = por %p147, %p148
    %p150 = scmp.ne.s32.totalorder %s139, %s140
    %p151 = scmp.eq.s32.totalorder %s15, 0
    %p152 = por %p150, %p151
    %p153 = scmp.ne.s32.totalorder %s139, %s140
    %p154 = scmp.eq.s32.totalorder %s16, 3
    %p155 = por %p153, %p154
    %p157 = scmp.ne.s32.totalorder %s140, %s156
    %p158 = scmp.eq.s32.totalorder %s16, 0
    %p159 = por %p157, %p158
    %p160 = scmp.le.s32.totalorder 1, %s10
    %p161 = scmp.lt.s32.totalorder %s10, 5
    %p162 = pnand %p160, %p161
    %p163 = pneg %p162
    // Predicated region
    $region9: #{downsample_forward.1} parent=5 // pred_check
      _
    $region10: #{downsample_forward.1} parent=5 // pred_check_branch
      %165 = sbr.rel (%p162) target = $region12
    $region11: #{downsample_forward.1} parent=5 // pred_region
      %s166 = ssub.s32 %s10, 1
      // Predicated region
      $region13: #{downsample_forward.1} parent=11 // pred_check
        %p167 = pneg %p103
      $region14: #{downsample_forward.1} parent=11 // pred_check_branch
        %169 = sbr.rel (%p167) target = $region16
      $region15: #{downsample_forward.1} parent=11 // pred_region
        _
      $region16: #{downsample_forward.1} parent=11 // pred_fallthru
        _
      // Predicated region
      $region17: #{downsample_forward.1} parent=11 // pred_check
        %p170 = pneg %p124
      $region18: #{downsample_forward.1} parent=11 // pred_check_branch
        %172 = sbr.rel (%p170) target = $region20
      $region19: #{downsample_forward.1} parent=11 // pred_region
        _
      $region20: #{downsample_forward.1} parent=11 // pred_fallthru
        _
    $region12: #{downsample_forward.1} parent=5 // pred_fallthru
      _
    %p173 = scmp.lt.s32.totalorder %s10, 4
    // Predicated region
    $region21: #{downsample_forward.1} parent=5 // pred_check
      %p174 = pneg %p173
    $region22: #{downsample_forward.1} parent=5 // pred_check_branch
      %176 = sbr.rel (%p174) target = $region24
    $region23: #{downsample_forward.1} parent=5 // pred_region
      // Predicated region
      $region25: #{downsample_forward.1} parent=23 // pred_check
        %p177 = pneg %p44
      $region26: #{downsample_forward.1} parent=23 // pred_check_branch
        %179 = sbr.rel (%p177) target = $region28
      $region27: #{downsample_forward.1} parent=23 // pred_region
        %s180 = smul.u32 4, %s18
        %s181 = ssub.s32 9, %s180
        %p182 = scmp.lt.s32.totalorder %s181, 4
        %s183 = scalar_select %p182, %s181, 4
        %s184 = smul.u32 4, %s183
        %s185 = smul.u32 %s184, 2
        %s186 = smul.u32 %s185, 2
        %s187 = smul.u32 %s186, 2
        %p188 = scmp.lt.s32.totalorder %s17, 1
        %s189 = scalar_select %p188, %s17, 1
        %p190 = scmp.lt.s32.totalorder %s180, 8
        %s191 = scalar_select %p190, %s180, 8
        %s192 = smul.addr %s191, 8
        %s193 = smul.addr %s189, 72
        %s194 = sadd.s32 %s192, %s193
        %s195 = smul.addr %s194, 4
        %s196 = scalar_lea.vmem %s0, %s195
        %s197 = smul.u32 4, %s18
        %s198 = ssub.s32 9, %s197
        %p199 = scmp.lt.s32.totalorder %s198, 4
        %s200 = scalar_select %p199, %s198, 4
        %s201 = smul.u32 4, %s200
        %s202 = smul.u32 %s201, 2
        %s203 = smul.u32 %s202, 2
        %s204 = smul.u32 %s203, 2
      $region28: #{downsample_forward.1} parent=23 // pred_fallthru
        _
      // Predicated region
      $region29: #{downsample_forward.1} parent=23 // pred_check
        %p205 = pneg %p76
      $region30: #{downsample_forward.1} parent=23 // pred_check_branch
        %207 = sbr.rel (%p205) target = $region32
      $region31: #{downsample_forward.1} parent=23 // pred_region
        %s208 = sadd.s32 %s18, 1
        %s209 = smul.u32 %s208, 4
        %p210 = scmp.lt.s32.totalorder %s17, 1
        %s211 = scalar_select %p210, %s17, 1
        %p212 = scmp.lt.s32.totalorder %s209, 8
        %s213 = scalar_select %p212, %s209, 8
        %s214 = smul.addr %s213, 8
        %s215 = smul.addr %s211, 72
        %s216 = sadd.s32 %s214, %s215
        %s217 = smul.addr %s216, 4
        %s218 = scalar_lea.vmem %s1, %s217
        %s219 = sadd.s32 %s18, 1
        %s220 = smul.u32 %s219, 4
      $region32: #{downsample_forward.1} parent=23 // pred_fallthru
        _
    $region24: #{downsample_forward.1} parent=5 // pred_fallthru
      _
    %p221 = scmp.le.s32.totalorder 1, %s10
    %p222 = scmp.lt.s32.totalorder %s10, 5
    %p223 = pnand %p221, %p222
    %p224 = pneg %p223
    // Predicated region
    $region33: #{downsample_forward.1} parent=5 // pred_check
      _
    $region34: #{downsample_forward.1} parent=5 // pred_check_branch
      %226 = sbr.rel (%p223) target = $region36
    $region35: #{downsample_forward.1} parent=5 // pred_region
      %s227 = ssub.s32 %s10, 1
      %s228 = smul.u32 4, %s20
      %s229 = ssub.s32 9, %s228
      %p230 = scmp.lt.s32.totalorder %s229, 4
      %s231 = scalar_select %p230, %s229, 4
      %s232 = smul.u32 4, %s231
      %s233 = smul.u32 %s232, 2
      %s234 = smul.u32 %s233, 2
      %s235 = smul.u32 %s234, 2
      %p236 = scmp.lt.s32.totalorder %s19, 1
      %s237 = scalar_select %p236, %s19, 1
      %p238 = scmp.lt.s32.totalorder %s228, 8
      %s239 = scalar_select %p238, %s228, 8
      %s240 = smul.addr %s239, 8
      %s241 = smul.addr %s237, 72
      %s242 = sadd.s32 %s240, %s241
      %s243 = smul.addr %s242, 4
      %s244 = scalar_lea.vmem %s0, %s243
      %p245 = pneg %p50
      %p246 = pneg %p47
      %s247 = sadd.s32 %s20, 1
      %s248 = smul.u32 %s247, 4
      %p249 = scmp.lt.s32.totalorder %s19, 1
      %s250 = scalar_select %p249, %s19, 1
      %p251 = scmp.lt.s32.totalorder %s248, 8
      %s252 = scalar_select %p251, %s248, 8
      %s253 = smul.addr %s252, 8
      %s254 = smul.addr %s250, 72
      %s255 = sadd.s32 %s253, %s254
      %s256 = smul.addr %s255, 4
      %s257 = scalar_lea.vmem %s1, %s256
      %p258 = pneg %p82
      %p259 = pneg %p79
      %p260 = pneg %p103
      %p261 = pneg %p100
      %p262 = pneg %p124
      %p263 = pneg %p121
      %p264 = pneg %p152
      %p265 = pneg %p149
      %s266 = smul.u32 4, %s20
      %p267 = scmp.lt.s32.totalorder %s19, 1
      %s268 = scalar_select %p267, %s19, 1
      %p269 = scmp.lt.s32.totalorder %s266, 7
      %s270 = scalar_select %p269, %s266, 7
      %s271 = smul.addr %s268, 8
      %s272 = sadd.s32 %s270, %s271
      %s273 = smul.addr %s272, 8
      %s274 = scalar_lea.vmem %s4, %s273
      %s275 = smul.u32 4, %s20
      %s276 = ssub.s32 9, %s275
      %p277 = scmp.lt.s32.totalorder %s276, 4
      %s278 = scalar_select %p277, %s276, 4
      %s279 = smul.u32 4, %s278
      %s280 = smul.u32 %s279, 2
      %s281 = smul.u32 %s280, 2
      %s282 = smul.u32 %s281, 2
      %p283 = scmp.lt.s32.totalorder %s19, 1
      %s284 = scalar_select %p283, %s19, 1
      %p285 = scmp.lt.s32.totalorder %s275, 8
      %s286 = scalar_select %p285, %s275, 8
      %s287 = smul.addr %s286, 8
      %s288 = smul.addr %s284, 72
      %s289 = sadd.s32 %s287, %s288
      %s290 = smul.addr %s289, 4
      %s291 = scalar_lea.vmem %s0, %s290
      %s292 = smul.u32 4, %s20
      %s293 = ssub.s32 9, %s292
      %p294 = scmp.lt.s32.totalorder %s293, 4
      %s295 = scalar_select %p294, %s293, 4
      %s296 = smul.u32 4, %s295
      %s297 = smul.u32 %s296, 2
      %s298 = smul.u32 %s297, 2
      %s299 = smul.u32 %s298, 2
      %s300 = sadd.s32 %s20, 1
      %s301 = smul.u32 %s300, 4
      %p302 = scmp.lt.s32.totalorder %s19, 1
      %s303 = scalar_select %p302, %s19, 1
      %p304 = scmp.lt.s32.totalorder %s301, 8
      %s305 = scalar_select %p304, %s301, 8
      %s306 = smul.addr %s305, 8
      %s307 = smul.addr %s303, 72
      %s308 = sadd.s32 %s306, %s307
      %s309 = smul.addr %s308, 4
      %s310 = scalar_lea.vmem %s1, %s309
      %s311 = sadd.s32 %s20, 1
      %s312 = smul.u32 %s311, 4
      %s313 = smul.u32 4, %s20
      %p314 = scmp.lt.s32.totalorder %s19, 1
      %s315 = scalar_select %p314, %s19, 1
      %p316 = scmp.lt.s32.totalorder %s313, 7
      %s317 = scalar_select %p316, %s313, 7
      %s318 = smul.addr %s315, 8
      %s319 = sadd.s32 %s317, %s318
      %s320 = smul.addr %s319, 8
      %s321 = scalar_lea.vmem %s4, %s320
      %s322 = smul.u32 4, %s20
      %v324 = vld [vmem:[%s291] sm:$0xf]
      %v325 = vld [vmem:[%s291 + $0x4] sm:$0x1]
      %v326 = vld [vmem:[%s291 + $0x8] sm:$0xf]
      %v327 = vld [vmem:[%s291 + $0x20] sm:$0xf]
      %v328 = vld [vmem:[%s291 + $0x24] sm:$0x1]
      %v329 = vld [vmem:[%s291 + $0x28] sm:$0xf]
      %v330 = vld [vmem:[%s291 + $0x40] sm:$0xf]
      %v331 = vld [vmem:[%s291 + $0x44] sm:$0x1]
      %v332 = vld [vmem:[%s291 + $0x48] sm:$0xf]
      %v333 = vld [vmem:[%s291 + $0x60] sm:$0xf]
      %v334 = vld [vmem:[%s291 + $0x64] sm:$0x1]
      %v335 = vld [vmem:[%s291 + $0x68] sm:$0xf]
      %s336 = scalar_lea.vmem %s291, 16
      %v337 = vld [vmem:[%s336] sm:$0xf]
      %v338 = vld [vmem:[%s336 + $0x4] sm:$0x1]
      %v339 = vld [vmem:[%s336 + $0x8] sm:$0xf]
      %v340 = vld [vmem:[%s336 + $0x20] sm:$0xf]
      %v341 = vld [vmem:[%s336 + $0x24] sm:$0x1]
      %v342 = vld [vmem:[%s336 + $0x28] sm:$0xf]
      %v343 = vld [vmem:[%s336 + $0x40] sm:$0xf]
      %v344 = vld [vmem:[%s336 + $0x44] sm:$0x1]
      %v345 = vld [vmem:[%s336 + $0x48] sm:$0xf]
      %v346 = vld [vmem:[%s336 + $0x60] sm:$0xf]
      %v347 = vld [vmem:[%s336 + $0x64] sm:$0x1]
      %v348 = vld [vmem:[%s336 + $0x68] sm:$0xf]
      %s349 = scalar_lea.vmem %s291, 32
      %v350 = vld [vmem:[%s349] sm:$0xf]
      %v351 = vld [vmem:[%s349 + $0x4] sm:$0x1]
      %v352 = vld [vmem:[%s349 + $0x8] sm:$0xf]
      %v353 = vld [vmem:[%s349 + $0x20] sm:$0xf]
      %v354 = vld [vmem:[%s349 + $0x24] sm:$0x1]
      %v355 = vld [vmem:[%s349 + $0x28] sm:$0xf]
      %v356 = vld [vmem:[%s349 + $0x40] sm:$0xf]
      %v357 = vld [vmem:[%s349 + $0x44] sm:$0x1]
      %v358 = vld [vmem:[%s349 + $0x48] sm:$0xf]
      %v359 = vld [vmem:[%s310] sm:$0xf]
      %v360 = vld [vmem:[%s310 + $0x4] sm:$0x1]
      %v361 = vld [vmem:[%s310 + $0x8] sm:$0xf]
      %v366 = vunpack.c.l.b16 %v326
      %v367 = vunpack.c.l.b16 %v329
      %v368 = vunpack.c.l.b16 %v332
      %v369 = vunpack.c.l.b16 %v335
      %v370 = vpack.c.b16 %v366, %v366
      %v371 = vpack.c.b16 %v367, %v367
      %v372 = vpack.c.b16 %v368, %v368
      %v373 = vpack.c.b16 %v369, %v369
      %374 = vrot.lane.b32.xlu0 %v370, 4
      %v375 = vpop.permute.xlu0 %374
      %376 = vrot.lane.b32.xlu0 %v371, 4
      %v377 = vpop.permute.xlu0 %376
      %378 = vrot.lane.b32.xlu0 %v372, 4
      %v379 = vpop.permute.xlu0 %378
      %380 = vrot.lane.b32.xlu0 %v373, 4
      %v381 = vpop.permute.xlu0 %380
      %v390 = vunpack.c.l.b16 %v324
      %v391 = vunpack.c.l.b16 %v325
      %v392 = vunpack.c.l.b16 %v327
      %v393 = vunpack.c.l.b16 %v328
      %v394 = vunpack.c.l.b16 %v330
      %v395 = vunpack.c.l.b16 %v331
      %v396 = vunpack.c.l.b16 %v333
      %v397 = vunpack.c.l.b16 %v334
      %v398 = vpack.c.b16 %v391, %v390
      %v399 = vpack.c.b16 %v393, %v392
      %v400 = vpack.c.b16 %v395, %v394
      %v401 = vpack.c.b16 %v397, %v396
      %v403 = vshrl.u32 %v398, 16
      %v405 = vshll.u32 %v398, 16
      %v407 = vrot.slane %v405, 1
      %v408 = vor.u32 %v403, %v407
      %v410 = vshrl.u32 %v399, 16
      %v412 = vshll.u32 %v399, 16
      %v414 = vrot.slane %v412, 1
      %v415 = vor.u32 %v410, %v414
      %v417 = vshrl.u32 %v400, 16
      %v419 = vshll.u32 %v400, 16
      %v421 = vrot.slane %v419, 1
      %v422 = vor.u32 %v417, %v421
      %v424 = vshrl.u32 %v401, 16
      %v426 = vshll.u32 %v401, 16
      %v428 = vrot.slane %v426, 1
      %v429 = vor.u32 %v424, %v428
      %430 = vrot.lane.b32.xlu0 %v408, 8
      %v431 = vpop.permute.xlu0 %430
      %432 = vrot.lane.b32.xlu0 %v415, 8
      %v433 = vpop.permute.xlu0 %432
      %434 = vrot.lane.b32.xlu0 %v422, 8
      %v435 = vpop.permute.xlu0 %434
      %436 = vrot.lane.b32.xlu0 %v429, 8
      %v437 = vpop.permute.xlu0 %436
      %vm438 = vcmask 31744
      %v441 = vsel %vm438, %v324, %v375
      %v444 = vsel %vm438, %v327, %v377
      %v447 = vsel %vm438, %v330, %v379
      %v450 = vsel %vm438, %v333, %v381
      %vm451 = vcmask 64512
      %v453 = vsel %vm451, %v441, %v431
      %v455 = vsel %vm451, %v444, %v433
      %v457 = vsel %vm451, %v447, %v435
      %v459 = vsel %vm451, %v450, %v437
      %v460 = vld [vmem:[%s2] sm:$0xf]
      %v461 = vld [vmem:[%s2 + $0x4] sm:$0x3]
      %v466 = vunpack.c.l.b16 %v339
      %v467 = vunpack.c.l.b16 %v342
      %v468 = vunpack.c.l.b16 %v345
      %v469 = vunpack.c.l.b16 %v348
      %v470 = vpack.c.b16 %v466, %v466
      %v471 = vpack.c.b16 %v467, %v467
      %v472 = vpack.c.b16 %v468, %v468
      %v473 = vpack.c.b16 %v469, %v469
      %474 = vrot.lane.b32.xlu0 %v470, 4
      %v475 = vpop.permute.xlu0 %474
      %476 = vrot.lane.b32.xlu0 %v471, 4
      %v477 = vpop.permute.xlu0 %476
      %478 = vrot.lane.b32.xlu0 %v472, 4
      %v479 = vpop.permute.xlu0 %478
      %480 = vrot.lane.b32.xlu0 %v473, 4
      %v481 = vpop.permute.xlu0 %480
      %v490 = vunpack.c.l.b16 %v337
      %v491 = vunpack.c.l.b16 %v338
      %v492 = vunpack.c.l.b16 %v340
      %v493 = vunpack.c.l.b16 %v341
      %v494 = vunpack.c.l.b16 %v343
      %v495 = vunpack.c.l.b16 %v344
      %v496 = vunpack.c.l.b16 %v346
      %v497 = vunpack.c.l.b16 %v347
      %v498 = vpack.c.b16 %v491, %v490
      %v499 = vpack.c.b16 %v493, %v492
      %v500 = vpack.c.b16 %v495, %v494
      %v501 = vpack.c.b16 %v497, %v496
      %v503 = vshrl.u32 %v498, 16
      %v505 = vshll.u32 %v498, 16
      %v507 = vrot.slane %v505, 1
      %v508 = vor.u32 %v503, %v507
      %v510 = vshrl.u32 %v499, 16
      %v512 = vshll.u32 %v499, 16
      %v514 = vrot.slane %v512, 1
      %v515 = vor.u32 %v510, %v514
      %v517 = vshrl.u32 %v500, 16
      %v519 = vshll.u32 %v500, 16
      %v521 = vrot.slane %v519, 1
      %v522 = vor.u32 %v517, %v521
      %v524 = vshrl.u32 %v501, 16
      %v526 = vshll.u32 %v501, 16
      %v528 = vrot.slane %v526, 1
      %v529 = vor.u32 %v524, %v528
      %530 = vrot.lane.b32.xlu0 %v508, 8
      %v531 = vpop.permute.xlu0 %530
      %532 = vrot.lane.b32.xlu0 %v515, 8
      %v533 = vpop.permute.xlu0 %532
      %534 = vrot.lane.b32.xlu0 %v522, 8
      %v535 = vpop.permute.xlu0 %534
      %536 = vrot.lane.b32.xlu0 %v529, 8
      %v537 = vpop.permute.xlu0 %536
      %v540 = vsel %vm438, %v337, %v475
      %v543 = vsel %vm438, %v340, %v477
      %v546 = vsel %vm438, %v343, %v479
      %v549 = vsel %vm438, %v346, %v481
      %v551 = vsel %vm451, %v540, %v531
      %v553 = vsel %vm451, %v543, %v533
      %v555 = vsel %vm451, %v546, %v535
      %v557 = vsel %vm451, %v549, %v537
      %s558 = scalar_lea.vmem %s2, 8
      %v559 = vld [vmem:[%s558] sm:$0xf]
      %v560 = vld [vmem:[%s558 + $0x4] sm:$0x3]
      %v565 = vunpack.c.l.b16 %v551
      %v566 = vunpack.c.l.b16 %v553
      %v567 = vunpack.c.l.b16 %v555
      %v568 = vunpack.c.l.b16 %v557
      %v569 = vpack.c.b16 %v566, %v565
      %v570 = vpack.c.b16 %v568, %v567
      %v573 = vunpack.c.l.b16 %v559
      %v574 = vunpack.c.l.b16 %v560
      %v575 = vpack.c.b16 %v574, %v573
      %vm576 = vcmask 97280
      %v578 = vsel %vm576, %v569, 0
      %v581 = vsel %vm576, %v570, 0
      %vm583 = vcmask 1045504
      %v585 = vsel %vm583, %v575, 0
      %587 = vmatpush.bf16.msra.mxu0 0
      %588 = vmatpush.bf16.msra.mxu0 0
      %589 = vmatpush.bf16.msra.mxu0 0
      %590 = vmatpush.bf16.msra.mxu0 0
      %591 = vmatpush.bf16.msra.mxu0 0
      %592 = vmatpush.bf16.msra.mxu0 0
      %593 = vmatpush.bf16.msra.mxu0 0
      %594 = vmatpush.bf16.msra.mxu0 %v585
      %595 = vmatmul.bf16.gmra.mxu0 %v578
      %v596 = vpop.f32.mrf.mxu0
      %v597 = vadd.f32 0.0, %v596
      %v598 = vpop.f32.mrf.mxu0
      %v599 = vadd.f32 0.0, %v598
      %600 = vmatmul.bf16.gmra.mxu0 %v581
      %v601 = vpop.f32.mrf.mxu0
      %v602 = vadd.f32 0.0, %v601
      %v603 = vpop.f32.mrf.mxu0
      %v604 = vadd.f32 0.0, %v603
      %605 = vdwg.mxu0
      %v610 = vunpack.c.l.b16 %v453
      %v611 = vunpack.c.l.b16 %v455
      %v612 = vunpack.c.l.b16 %v457
      %v613 = vunpack.c.l.b16 %v459
      %v614 = vpack.c.b16 %v611, %v610
      %v615 = vpack.c.b16 %v613, %v612
      %v618 = vunpack.c.l.b16 %v460
      %v619 = vunpack.c.l.b16 %v461
      %v620 = vpack.c.b16 %v619, %v618
      %v622 = vsel %vm576, %v614, 0
      %v625 = vsel %vm576, %v615, 0
      %v628 = vsel %vm583, %v620, 0
      %630 = vmatpush.bf16.msra.mxu0 0
      %631 = vmatpush.bf16.msra.mxu0 0
      %632 = vmatpush.bf16.msra.mxu0 0
      %633 = vmatpush.bf16.msra.mxu0 0
      %634 = vmatpush.bf16.msra.mxu0 0
      %635 = vmatpush.bf16.msra.mxu0 0
      %636 = vmatpush.bf16.msra.mxu0 0
      %637 = vmatpush.bf16.msra.mxu0 %v628
      %638 = vmatmul.bf16.gmra.mxu0 %v622
      %v639 = vpop.f32.mrf.mxu0
      %v640 = vadd.f32 %v597, %v639
      %v641 = vpop.f32.mrf.mxu0
      %v642 = vadd.f32 %v599, %v641
      %643 = vmatmul.bf16.gmra.mxu0 %v625
      %v644 = vpop.f32.mrf.mxu0
      %v645 = vadd.f32 %v602, %v644
      %v646 = vpop.f32.mrf.mxu0
      %v647 = vadd.f32 %v604, %v646
      %648 = vdwg.mxu0
      %v653 = vunpack.c.l.b16 %v352
      %v654 = vunpack.c.l.b16 %v355
      %v655 = vunpack.c.l.b16 %v358
      %v656 = vunpack.c.l.b16 %v361
      %v657 = vpack.c.b16 %v653, %v653
      %v658 = vpack.c.b16 %v654, %v654
      %v659 = vpack.c.b16 %v655, %v655
      %v660 = vpack.c.b16 %v656, %v656
      %661 = vrot.lane.b32.xlu0 %v657, 4
      %v662 = vpop.permute.xlu0 %661
      %663 = vrot.lane.b32.xlu0 %v658, 4
      %v664 = vpop.permute.xlu0 %663
      %665 = vrot.lane.b32.xlu0 %v659, 4
      %v666 = vpop.permute.xlu0 %665
      %667 = vrot.lane.b32.xlu0 %v660, 4
      %v668 = vpop.permute.xlu0 %667
      %v677 = vunpack.c.l.b16 %v350
      %v678 = vunpack.c.l.b16 %v351
      %v679 = vunpack.c.l.b16 %v353
      %v680 = vunpack.c.l.b16 %v354
      %v681 = vunpack.c.l.b16 %v356
      %v682 = vunpack.c.l.b16 %v357
      %v683 = vunpack.c.l.b16 %v359
      %v684 = vunpack.c.l.b16 %v360
      %v685 = vpack.c.b16 %v678, %v677
      %v686 = vpack.c.b16 %v680, %v679
      %v687 = vpack.c.b16 %v682, %v681
      %v688 = vpack.c.b16 %v684, %v683
      %v690 = vshrl.u32 %v685, 16
      %v692 = vshll.u32 %v685, 16
      %v694 = vrot.slane %v692, 1
      %v695 = vor.u32 %v690, %v694
      %v697 = vshrl.u32 %v686, 16
      %v699 = vshll.u32 %v686, 16
      %v701 = vrot.slane %v699, 1
      %v702 = vor.u32 %v697, %v701
      %v704 = vshrl.u32 %v687, 16
      %v706 = vshll.u32 %v687, 16
      %v708 = vrot.slane %v706, 1
      %v709 = vor.u32 %v704, %v708
      %v711 = vshrl.u32 %v688, 16
      %v713 = vshll.u32 %v688, 16
      %v715 = vrot.slane %v713, 1
      %v716 = vor.u32 %v711, %v715
      %717 = vrot.lane.b32.xlu0 %v695, 8
      %v718 = vpop.permute.xlu0 %717
      %719 = vrot.lane.b32.xlu0 %v702, 8
      %v720 = vpop.permute.xlu0 %719
      %721 = vrot.lane.b32.xlu0 %v709, 8
      %v722 = vpop.permute.xlu0 %721
      %723 = vrot.lane.b32.xlu0 %v716, 8
      %v724 = vpop.permute.xlu0 %723
      %v727 = vsel %vm438, %v350, %v662
      %v730 = vsel %vm438, %v353, %v664
      %v733 = vsel %vm438, %v356, %v666
      %v736 = vsel %vm438, %v359, %v668
      %v738 = vsel %vm451, %v727, %v718
      %v740 = vsel %vm451, %v730, %v720
      %v742 = vsel %vm451, %v733, %v722
      %v744 = vsel %vm451, %v736, %v724
      %s745 = scalar_lea.vmem %s2, 16
      %v746 = vld [vmem:[%s745] sm:$0xf]
      %v747 = vld [vmem:[%s745 + $0x4] sm:$0x3]
      %v752 = vunpack.c.l.b16 %v738
      %v753 = vunpack.c.l.b16 %v740
      %v754 = vunpack.c.l.b16 %v742
      %v755 = vunpack.c.l.b16 %v744
      %v756 = vpack.c.b16 %v753, %v752
      %v757 = vpack.c.b16 %v755, %v754
      %v760 = vunpack.c.l.b16 %v746
      %v761 = vunpack.c.l.b16 %v747
      %v762 = vpack.c.b16 %v761, %v760
      %v764 = vsel %vm576, %v756, 0
      %v767 = vsel %vm576, %v757, 0
      %v770 = vsel %vm583, %v762, 0
      %772 = vmatpush.bf16.msra.mxu0 0
      %773 = vmatpush.bf16.msra.mxu0 0
      %774 = vmatpush.bf16.msra.mxu0 0
      %775 = vmatpush.bf16.msra.mxu0 0
      %776 = vmatpush.bf16.msra.mxu0 0
      %777 = vmatpush.bf16.msra.mxu0 0
      %778 = vmatpush.bf16.msra.mxu0 0
      %779 = vmatpush.bf16.msra.mxu0 %v770
      %780 = vmatmul.bf16.gmra.mxu0 %v764
      %v781 = vpop.f32.mrf.mxu0
      %v782 = vadd.f32 0.0, %v781
      %v783 = vpop.f32.mrf.mxu0
      %v784 = vadd.f32 0.0, %v783
      %785 = vmatmul.bf16.gmra.mxu0 %v767
      %v786 = vpop.f32.mrf.mxu0
      %v787 = vadd.f32 0.0, %v786
      %v788 = vpop.f32.mrf.mxu0
      %v789 = vadd.f32 0.0, %v788
      %790 = vdwg.mxu0
      %v791 = vadd.f32 %v640, %v782
      %v792 = vadd.f32 %v642, %v784
      %v793 = vadd.f32 %v645, %v787
      %v794 = vadd.f32 %v647, %v789
      %v795 = vld [vmem:[%s3] sm:$0x1]
      %v797 = vperm.slane %v795, 0
      %v799 = vadd.f32 %v791, %v797
      %v800 = vadd.f32 %v792, %v797
      %v801 = vadd.f32 %v793, %v797
      %v802 = vadd.f32 %v794, %v797
      %803 = vst [vmem:[%s321] sm:$0xff] %v799
      %804 = vst [vmem:[%s321 + $0x8] sm:$0xff] %v800
      %805 = vst [vmem:[%s321 + $0x10] sm:$0xff] %v801
      %806 = vst [vmem:[%s321 + $0x18] sm:$0xff] %v802
      %s807 = smul.u32 4, %s20
      %p808 = scmp.lt.s32.totalorder %s19, 1
      %s809 = scalar_select %p808, %s19, 1
      %p810 = scmp.lt.s32.totalorder %s807, 7
      %s811 = scalar_select %p810, %s807, 7
      %s812 = smul.addr %s809, 8
      %s813 = sadd.s32 %s811, %s812
      %s814 = smul.addr %s813, 8
      %s815 = scalar_lea.vmem %s4, %s814
      // Predicated region
      $region37: #{downsample_forward.1} parent=35 // pred_check
        %p816 = pneg %p149
      $region38: #{downsample_forward.1} parent=35 // pred_check_branch
        %818 = sbr.rel (%p816) target = $region40
      $region39: #{downsample_forward.1} parent=35 // pred_region
        %s819 = smul.u32 4, %s20
      $region40: #{downsample_forward.1} parent=35 // pred_fallthru
        _
    $region36: #{downsample_forward.1} parent=5 // pred_fallthru
      _
    %p820 = scmp.le.s32.totalorder 2, %s10
    // Predicated region
    $region41: #{downsample_forward.1} parent=5 // pred_check
      %p821 = pneg %p820
    $region42: #{downsample_forward.1} parent=5 // pred_check_branch
      %823 = sbr.rel (%p821) target = $region44
    $region43: #{downsample_forward.1} parent=5 // pred_region
      %s824 = ssub.s32 %s10, 2
      // Predicated region
      $region45: #{downsample_forward.1} parent=43 // pred_check
        %p825 = pneg %p155
      $region46: #{downsample_forward.1} parent=43 // pred_check_branch
        %827 = sbr.rel (%p825) target = $region48
      $region47: #{downsample_forward.1} parent=43 // pred_region
        %s828 = smul.u32 4, %s22
        %p829 = scmp.lt.s32.totalorder %s21, 1
        %s830 = scalar_select %p829, %s21, 1
        %p831 = scmp.lt.s32.totalorder %s828, 7
        %s832 = scalar_select %p831, %s828, 7
        %s833 = smul.addr %s830, 8
        %s834 = sadd.s32 %s832, %s833
        %s835 = smul.addr %s834, 8
        %s836 = scalar_lea.vmem %s4, %s835
      $region48: #{downsample_forward.1} parent=43 // pred_fallthru
        _
    $region44: #{downsample_forward.1} parent=5 // pred_fallthru
      _
  $region6: #{downsample_forward.1} parent=0 // loop_footer
    %s14 = sadd.s32 1, %s10
  $region7: #{downsample_forward.1} parent=0 // loop_footer_branch
    %9 = sbr.rel target = $region3
  $region8: #{downsample_forward.1} parent=0 // loop_exit
    _

</llo_original>
